<compile_context>
chip_gen: v5e
topology: v5e:2x2
jax: 0.10.0
libtpu: 0.0.40
codegen_flags: <defaults>
</compile_context>

<pallas_src>
import functools
import math

import jax
import jax.numpy as jnp
from jax.experimental import pallas as pl
from jax.experimental.pallas import tpu as pltpu

LANES = 128
MAX_TILE_R = 1024  # (1024, 128) f32 block = 512 KiB/input; safe on v5e/v6e/v7x


def _dice_loss_kernel(pred_ref, true_ref, out_ref,
                      acc_i_ref, acc_p_ref, acc_t_ref,
                      *, smooth, total, tile_r, masked_tail):
    i = pl.program_id(0)
    last = pl.num_programs(0) - 1

    @pl.when(i == 0)
    def _():
        acc_i_ref[...] = jnp.zeros_like(acc_i_ref)
        acc_p_ref[...] = jnp.zeros_like(acc_p_ref)
        acc_t_ref[...] = jnp.zeros_like(acc_t_ref)

    p = jax.nn.sigmoid(pred_ref[...].astype(jnp.float32))
    t = true_ref[...].astype(jnp.float32)

    def fold(x):
        # (tile_r, 128) -> (8, 128): partial sums along the leading axis,
        # pure VPU adds (no cross-lane traffic).
        return jnp.sum(x.reshape(tile_r // 8, 8, LANES), axis=0)

    def accumulate(p_v, t_v):
        acc_i_ref[...] += fold(p_v * t_v)   # intersection partials
        acc_p_ref[...] += fold(p_v)         # sum(sigmoid(pred)) partials
        acc_t_ref[...] += fold(t_v)         # sum(true) partials

    if masked_tail:
        # Only the last tile can contain out-of-range elements.
        @pl.when(i == last)
        def _():
            row = jax.lax.broadcasted_iota(jnp.int32, (tile_r, LANES), 0)
            col = jax.lax.broadcasted_iota(jnp.int32, (tile_r, LANES), 1)
            elem = (row + i * tile_r) * LANES + col
            valid = elem < total
            # Mask after the sigmoid: sigmoid(pad) != 0, so p must be zeroed.
            accumulate(jnp.where(valid, p, 0.0), jnp.where(valid, t, 0.0))

        @pl.when(i != last)
        def _():
            accumulate(p, t)
    else:
        accumulate(p, t)

    @pl.when(i == last)
    def _():
        inter = jnp.sum(acc_i_ref[...])
        denom = jnp.sum(acc_p_ref[...]) + jnp.sum(acc_t_ref[...])
        dice = (2.0 * inter + smooth) / (denom + smooth)
        out_ref[0, 0] = 1.0 - dice


def dice_loss(y_pred, y_true, smooth: float = 1.0):
    """Pallas equivalent of DiceLoss.forward (flat_tensors=True)."""
    assert y_pred.shape == y_true.shape
    total = int(math.prod(y_pred.shape))

    p_flat = jnp.reshape(y_pred, (-1,))
    t_flat = jnp.reshape(y_true, (-1,))

    rem = total % LANES
    if rem != 0:
        # Tiny (<128 elements) pad just to make the slab lane-dense; the padded
        # elements are masked out inside the kernel so the pad value is moot.
        pad = LANES - rem
        p_flat = jnp.pad(p_flat, (0, pad))
        t_flat = jnp.pad(t_flat, (0, pad))

    rows = p_flat.shape[0] // LANES
    p2 = p_flat.reshape(rows, LANES)
    t2 = t_flat.reshape(rows, LANES)

    # Row tile: as large as possible (amortize grid-step overhead), multiple of
    # 8 sublanes, capped so 2 inputs x 2 pipeline buffers stay tiny vs VMEM.
    tile_r = min(MAX_TILE_R, ((rows + 7) // 8) * 8)
    grid = (pl.cdiv(rows, tile_r),)
    masked_tail = (grid[0] * tile_r * LANES) != total

    out = pl.pallas_call(
        functools.partial(
            _dice_loss_kernel,
            smooth=float(smooth),
            total=total,
            tile_r=tile_r,
            masked_tail=masked_tail,
        ),
        out_shape=jax.ShapeDtypeStruct((1, 1), jnp.float32),
        grid_spec=pltpu.PrefetchScalarGridSpec(
            num_scalar_prefetch=0,
            grid=grid,
            in_specs=[
                pl.BlockSpec((tile_r, LANES), lambda i: (i, 0)),
                pl.BlockSpec((tile_r, LANES), lambda i: (i, 0)),
            ],
            out_specs=pl.BlockSpec(memory_space=pltpu.MemorySpace.SMEM),
            scratch_shapes=[
                pltpu.VMEM((8, LANES), jnp.float32),  # intersection acc
                pltpu.VMEM((8, LANES), jnp.float32),  # sum(sigmoid(pred)) acc
                pltpu.VMEM((8, LANES), jnp.float32),  # sum(true) acc
            ],
        ),
        compiler_params=pltpu.CompilerParams(
            dimension_semantics=("arbitrary",),
        ),
    )(p2, t2)

    # TODO(synk): on v7x (2 TCs/chip) an extra ~2x is available by splitting the
    # reduction across TensorCores; single-core path kept for portability.
    return out[0, 0]


def _dice_loss_ref(y_pred, y_true, smooth=1.0):
    """Pure-JAX reference mirroring the PyTorch module."""
    p = jax.nn.sigmoid(y_pred.astype(jnp.float32)).reshape(-1)
    t = y_true.astype(jnp.float32).reshape(-1)
    inter = jnp.sum(p * t)
    dice = (2.0 * inter + smooth) / (jnp.sum(p) + jnp.sum(t) + smooth)
    return 1.0 - dice


if __name__ == "__main__":
    key = jax.random.PRNGKey(0)
    k1, k2 = jax.random.split(key)

    # NCHW, small shapes: batch=2, channels=4, spatial=16x16
    y_pred = jax.random.normal(k1, (2, 4, 16, 16), dtype=jnp.float32)
    y_true = (jax.random.uniform(k2, (2, 4, 16, 16)) > 0.5).astype(jnp.float32)

    loss = jax.block_until_ready(dice_loss(y_pred, y_true, smooth=1.0))
    ref = _dice_loss_ref(y_pred, y_true, smooth=1.0)

    assert jnp.allclose(loss, ref, atol=1e-5, rtol=1e-5), (loss, ref)
    print("KERNEL_OK")
</pallas_src>

<mosaic_0001>
module attributes {stable_mosaic.version = 11 : i64} {
  func.func @_dice_loss_kernel(%arg0: i32, %arg1: memref<16x128xf32, #tpu.memory_space<vmem>>, %arg2: memref<16x128xf32, #tpu.memory_space<vmem>>, %arg3: memref<1x1xf32, #tpu.memory_space<smem>>, %arg4: memref<8x128xf32, #tpu.memory_space<vmem>>, %arg5: memref<8x128xf32, #tpu.memory_space<vmem>>, %arg6: memref<8x128xf32, #tpu.memory_space<vmem>>) attributes {dimension_semantics = [#tpu.dimension_semantics<arbitrary>], iteration_bounds = array<i64: 1>, scalar_prefetch = 0 : i64, scratch_operands = 3 : i64, tpu.core_type = #tpu.core_type<tc>, window_params = [{transform_indices = @transform_0, window_bounds = array<i64: 16, 128>}, {transform_indices = @transform_1, window_bounds = array<i64: 16, 128>}, {transform_indices = @transform_2, window_bounds = array<i64: 1, 1>}]} {
    %c0_i32 = arith.constant 0 : i32
    %0 = arith.cmpi eq, %arg0, %c0_i32 : i32
    %1 = arith.extui %0 : i1 to i32
    %c0_i32_0 = arith.constant 0 : i32
    %2 = arith.cmpi ne, %1, %c0_i32_0 : i32
    scf.if %2 {
      %cst_21 = arith.constant 0.000000e+00 : f32
      %29 = vector.broadcast %cst_21 : f32 to vector<8x128xf32>
      %c0_22 = arith.constant 0 : index
      %c0_23 = arith.constant 0 : index
      %30 = vector.load %arg4[%c0_22, %c0_23] : memref<8x128xf32, #tpu.memory_space<vmem>>, vector<8x128xf32>
      tpu.vector_store %arg4[%c0_22, %c0_23], %29 {strides = array<i32>} : memref<8x128xf32, #tpu.memory_space<vmem>>, vector<8x128xf32>,
      %cst_24 = arith.constant 0.000000e+00 : f32
      %31 = vector.broadcast %cst_24 : f32 to vector<8x128xf32>
      %c0_25 = arith.constant 0 : index
      %c0_26 = arith.constant 0 : index
      %32 = vector.load %arg5[%c0_25, %c0_26] : memref<8x128xf32, #tpu.memory_space<vmem>>, vector<8x128xf32>
      tpu.vector_store %arg5[%c0_25, %c0_26], %31 {strides = array<i32>} : memref<8x128xf32, #tpu.memory_space<vmem>>, vector<8x128xf32>,
      %cst_27 = arith.constant 0.000000e+00 : f32
      %33 = vector.broadcast %cst_27 : f32 to vector<8x128xf32>
      %c0_28 = arith.constant 0 : index
      %c0_29 = arith.constant 0 : index
      %34 = vector.load %arg6[%c0_28, %c0_29] : memref<8x128xf32, #tpu.memory_space<vmem>>, vector<8x128xf32>
      tpu.vector_store %arg6[%c0_28, %c0_29], %33 {strides = array<i32>} : memref<8x128xf32, #tpu.memory_space<vmem>>, vector<8x128xf32>,
    } else {
    }
    %c0 = arith.constant 0 : index
    %c0_1 = arith.constant 0 : index
    %3 = vector.load %arg1[%c0, %c0_1] : memref<16x128xf32, #tpu.memory_space<vmem>>, vector<16x128xf32>
    %4 = arith.negf %3 : vector<16x128xf32>
    %5 = math.exp %4 : vector<16x128xf32>
    %cst = arith.constant 1.000000e+00 : f32
    %6 = vector.broadcast %cst : f32 to vector<16x128xf32>
    %7 = arith.addf %6, %5 : vector<16x128xf32>
    %8 = arith.divf %6, %7 : vector<16x128xf32>
    %c0_2 = arith.constant 0 : index
    %c0_3 = arith.constant 0 : index
    %9 = vector.load %arg2[%c0_2, %c0_3] : memref<16x128xf32, #tpu.memory_space<vmem>>, vector<16x128xf32>
    %c0_4 = arith.constant 0 : index
    %c0_5 = arith.constant 0 : index
    %10 = vector.load %arg4[%c0_4, %c0_5] : memref<8x128xf32, #tpu.memory_space<vmem>>, vector<8x128xf32>
    %11 = arith.mulf %8, %9 : vector<16x128xf32>
    %12 = vector.shape_cast %11 : vector<16x128xf32> to vector<2x8x128xf32>
    %cst_6 = arith.constant dense<0.000000e+00> : vector<8x128xf32>
    %13 = vector.multi_reduction <add>, %12, %cst_6 [0] : vector<2x8x128xf32> to vector<8x128xf32>
    %14 = arith.addf %10, %13 : vector<8x128xf32>
    %c0_7 = arith.constant 0 : index
    %c0_8 = arith.constant 0 : index
    %15 = vector.load %arg4[%c0_7, %c0_8] : memref<8x128xf32, #tpu.memory_space<vmem>>, vector<8x128xf32>
    tpu.vector_store %arg4[%c0_7, %c0_8], %14 {strides = array<i32>} : memref<8x128xf32, #tpu.memory_space<vmem>>, vector<8x128xf32>,
    %c0_9 = arith.constant 0 : index
    %c0_10 = arith.constant 0 : index
    %16 = vector.load %arg5[%c0_9, %c0_10] : memref<8x128xf32, #tpu.memory_space<vmem>>, vector<8x128xf32>
    %17 = vector.shape_cast %8 : vector<16x128xf32> to vector<2x8x128xf32>
    %cst_11 = arith.constant dense<0.000000e+00> : vector<8x128xf32>
    %18 = vector.multi_reduction <add>, %17, %cst_11 [0] : vector<2x8x128xf32> to vector<8x128xf32>
    %19 = arith.addf %16, %18 : vector<8x128xf32>
    %c0_12 = arith.constant 0 : index
    %c0_13 = arith.constant 0 : index
    %20 = vector.load %arg5[%c0_12, %c0_13] : memref<8x128xf32, #tpu.memory_space<vmem>>, vector<8x128xf32>
    tpu.vector_store %arg5[%c0_12, %c0_13], %19 {strides = array<i32>} : memref<8x128xf32, #tpu.memory_space<vmem>>, vector<8x128xf32>,
    %c0_14 = arith.constant 0 : index
    %c0_15 = arith.constant 0 : index
    %21 = vector.load %arg6[%c0_14, %c0_15] : memref<8x128xf32, #tpu.memory_space<vmem>>, vector<8x128xf32>
    %22 = vector.shape_cast %9 : vector<16x128xf32> to vector<2x8x128xf32>
    %cst_16 = arith.constant dense<0.000000e+00> : vector<8x128xf32>
    %23 = vector.multi_reduction <add>, %22, %cst_16 [0] : vector<2x8x128xf32> to vector<8x128xf32>
    %24 = arith.addf %21, %23 : vector<8x128xf32>
    %c0_17 = arith.constant 0 : index
    %c0_18 = arith.constant 0 : index
    %25 = vector.load %arg6[%c0_17, %c0_18] : memref<8x128xf32, #tpu.memory_space<vmem>>, vector<8x128xf32>
    tpu.vector_store %arg6[%c0_17, %c0_18], %24 {strides = array<i32>} : memref<8x128xf32, #tpu.memory_space<vmem>>, vector<8x128xf32>,
    %c0_i32_19 = arith.constant 0 : i32
    %26 = arith.cmpi eq, %arg0, %c0_i32_19 : i32
    %27 = arith.extui %26 : i1 to i32
    %c0_i32_20 = arith.constant 0 : i32
    %28 = arith.cmpi ne, %27, %c0_i32_20 : i32
    scf.if %28 {
      %c0_21 = arith.constant 0 : index
      %c0_22 = arith.constant 0 : index
      %29 = vector.load %arg4[%c0_21, %c0_22] : memref<8x128xf32, #tpu.memory_space<vmem>>, vector<8x128xf32>
      %30 = vector.shape_cast %29 : vector<8x128xf32> to vector<1x8x128xf32>
      %cst_23 = arith.constant dense<0.000000e+00> : vector<1xf32>
      %31 = vector.multi_reduction <add>, %30, %cst_23 [1, 2] : vector<1x8x128xf32> to vector<1xf32>
      %32 = vector.shape_cast %31 : vector<1xf32> to vector<1x1x1xf32>
      %33 = vector.extract %32[0, 0, 0] : f32 from vector<1x1x1xf32>
      %c0_24 = arith.constant 0 : index
      %c0_25 = arith.constant 0 : index
      %34 = vector.load %arg5[%c0_24, %c0_25] : memref<8x128xf32, #tpu.memory_space<vmem>>, vector<8x128xf32>
      %35 = vector.shape_cast %34 : vector<8x128xf32> to vector<1x8x128xf32>
      %cst_26 = arith.constant dense<0.000000e+00> : vector<1xf32>
      %36 = vector.multi_reduction <add>, %35, %cst_26 [1, 2] : vector<1x8x128xf32> to vector<1xf32>
      %37 = vector.shape_cast %36 : vector<1xf32> to vector<1x1x1xf32>
      %38 = vector.extract %37[0, 0, 0] : f32 from vector<1x1x1xf32>
      %c0_27 = arith.constant 0 : index
      %c0_28 = arith.constant 0 : index
      %39 = vector.load %arg6[%c0_27, %c0_28] : memref<8x128xf32, #tpu.memory_space<vmem>>, vector<8x128xf32>
      %40 = vector.shape_cast %39 : vector<8x128xf32> to vector<1x8x128xf32>
      %cst_29 = arith.constant dense<0.000000e+00> : vector<1xf32>
      %41 = vector.multi_reduction <add>, %40, %cst_29 [1, 2] : vector<1x8x128xf32> to vector<1xf32>
      %42 = vector.shape_cast %41 : vector<1xf32> to vector<1x1x1xf32>
      %43 = vector.extract %42[0, 0, 0] : f32 from vector<1x1x1xf32>
      %44 = arith.addf %38, %43 : f32
      %cst_30 = arith.constant 2.000000e+00 : f32
      %45 = arith.mulf %cst_30, %33 : f32
      %cst_31 = arith.constant 1.000000e+00 : f32
      %46 = arith.addf %45, %cst_31 : f32
      %cst_32 = arith.constant 1.000000e+00 : f32
      %47 = arith.addf %44, %cst_32 : f32
      %48 = arith.divf %46, %47 : f32
      %cst_33 = arith.constant 1.000000e+00 : f32
      %49 = arith.subf %cst_33, %48 : f32
      %c0_34 = arith.constant 0 : index
      %c0_35 = arith.constant 0 : index
      %50 = memref.load %arg3[%c0_34, %c0_35] : memref<1x1xf32, #tpu.memory_space<smem>>
      memref.store %49, %arg3[%c0_34, %c0_35] : memref<1x1xf32, #tpu.memory_space<smem>>
    } else {
    }
    return
  }
  func.func @transform_0(%arg0: i32) -> (i32, i32) {
    %c0_i32 = arith.constant 0 : i32
    %c0_i32_0 = arith.constant 0 : i32
    return %arg0, %c0_i32 : i32, i32
  }
  func.func @transform_1(%arg0: i32) -> (i32, i32) {
    %c0_i32 = arith.constant 0 : i32
    %c0_i32_0 = arith.constant 0 : i32
    return %arg0, %c0_i32 : i32, i32
  }
  func.func @transform_2(%arg0: i32) -> (i32, i32) {
    %c0_i32 = arith.constant 0 : i32
    %c0_i32_0 = arith.constant 0 : i32
    %c0_i32_1 = arith.constant 0 : i32
    return %c0_i32, %c0_i32_0 : i32, i32
  }
}

</mosaic_0001>

<llo_original>
// kernel: tpu_custom_call.1
$region0: #{tpu_custom_call.1}
  #allocation0 [shape = 'u32[]', space=smem, size = 0x4, offset = 0x4, fixed_abs, tag = 'smem constant byte address 0x4 - core index']
  #allocation1 [shape = 'u32[72,128]{1,0:T(1,128)}', space=vmem, size = 0x9000, scoped, tag = 'internal scratch']
  #allocation2 [shape = 'f32[8,128]{1,0:T(8,128)}', space=vmem, size = 0x1000, scoped, tag = 'scratch operand']
  #allocation3 [shape = 'f32[8,128]{1,0:T(8,128)}', space=vmem, size = 0x1000, scoped, tag = 'scratch operand']
  #allocation4 [shape = 'f32[8,128]{1,0:T(8,128)}', space=vmem, size = 0x1000, scoped, tag = 'scratch operand']
  %s0 = inlined_call_operand.hbm [shape: f32[16,128], index: 0, kind: input, shape index: {}]
  %s1 = inlined_call_operand.hbm [shape: f32[16,128], index: 1, kind: input, shape index: {}]
  %s2 = inlined_call_operand.hbm [shape: f32[1,1], index: 2, kind: output, shape index: {}]
  %s3 = sld [smem:[#allocation0]]
  $region34: #{tpu_custom_call.1} parent=0
    _
  %s5 = ssub.s32 1, %s3
  %s6 = scalar_select 0, %s5, %s3
  $region1: #{tpu_custom_call.1} parent=0
    #allocation5 [shape = 'u8[8192]{0}', space=vmem, size = 0x2000, scoped, tag = 'input window, operand 0, single buffered']
    #allocation6 [shape = 's32[1]{0}', space=sflag, size = 0x4, scoped, tag = 'scoped memory for tpu_custom_call.1']
    #allocation7 [shape = 's32[1]{0}', space=sflag, size = 0x4, scoped, tag = 'scoped memory for tpu_custom_call.1']
    #allocation8 [shape = 'u8[8192]{0}', space=vmem, size = 0x2000, scoped, tag = 'input window, operand 1, single buffered']
    #allocation9 [shape = 's32[1]{0}', space=sflag, size = 0x4, scoped, tag = 'scoped memory for tpu_custom_call.1']
    #allocation10 [shape = 'u8[512]{0}', space=smem, size = 0x200, scoped, tag = 'output window, operand 0, single buffered']
    %7 = vsyncpa [#allocation6], 0
    %8 = vsyncpa [#allocation9], 0
    %9 = vsyncpa [#allocation7], 0
    // Predicated region
    $region2: #{tpu_custom_call.1} parent=1 // pred_check
      _
    $region3: #{tpu_custom_call.1} parent=1 // pred_check_branch
      %11 = sbr.rel (0) target = $region5
    $region4: #{tpu_custom_call.1} parent=1 // pred_region
      %13 = vsyncadd [#allocation6], 0
      %s14 = sshll.u32 %s0, 4
      %s15 = int_to_ptr.hbm [resolvable:$true] %s14
      %s16 = sshll.u32 [#allocation5], 4
      %s17 = int_to_ptr.vmem [resolvable:$true] %s16
      %22 = dma.hbm_to_vmem [thread:$0]  %s15, 256, %s17, [#allocation6], 128, 128, 8
    $region5: #{tpu_custom_call.1} parent=1 // pred_fallthru
      _
    // Predicated region
    $region6: #{tpu_custom_call.1} parent=1 // pred_check
      _
    $region7: #{tpu_custom_call.1} parent=1 // pred_check_branch
      %24 = sbr.rel (0) target = $region9
    $region8: #{tpu_custom_call.1} parent=1 // pred_region
      %26 = vsyncadd [#allocation9], 0
      %s27 = sshll.u32 %s1, 4
      %s28 = int_to_ptr.hbm [resolvable:$true] %s27
      %s29 = sshll.u32 [#allocation8], 4
      %s30 = int_to_ptr.vmem [resolvable:$true] %s29
      %35 = dma.hbm_to_vmem [thread:$0]  %s28, 256, %s30, [#allocation9], 128, 128, 8
    $region9: #{tpu_custom_call.1} parent=1 // pred_fallthru
      _
    // Predicated region
    $region10: #{tpu_custom_call.1} parent=1 // pred_check
      _
    $region11: #{tpu_custom_call.1} parent=1 // pred_check_branch
      %37 = sbr.rel (0) target = $region13
    $region12: #{tpu_custom_call.1} parent=1 // pred_region
      %39 = dma.done [#allocation6], 256
    $region13: #{tpu_custom_call.1} parent=1 // pred_fallthru
      _
    // Predicated region
    $region14: #{tpu_custom_call.1} parent=1 // pred_check
      _
    $region15: #{tpu_custom_call.1} parent=1 // pred_check_branch
      %41 = sbr.rel (0) target = $region17
    $region16: #{tpu_custom_call.1} parent=1 // pred_region
      %43 = dma.done [#allocation9], 256
    $region17: #{tpu_custom_call.1} parent=1 // pred_fallthru
      _
    %p44 = scmp.eq.s32.totalorder 0, 0
    // Predicated region
    $region18: #{tpu_custom_call.1} parent=1 // pred_check
      %p45 = pneg %p44
    $region19: #{tpu_custom_call.1} parent=1 // pred_check_branch
      %47 = sbr.rel (%p45) target = $region21
    $region20: #{tpu_custom_call.1} parent=1 // pred_region
      %48 = vst [vmem:[#allocation2] sm:$0xff] 0.0
      %49 = vst [vmem:[#allocation3] sm:$0xff] 0.0
      %50 = vst [vmem:[#allocation4] sm:$0xff] 0.0
    $region21: #{tpu_custom_call.1} parent=1 // pred_fallthru
      _
    %v51 = vld [vmem:[#allocation5] sm:$0xff]
    %v52 = vld [vmem:[#allocation5 + $0x8] sm:$0xff]
    %v53 = vxor.u32 %v51, 2147483648
    %v54 = vxor.u32 %v52, 2147483648
    %v55 = vmul.f32 %v53, 1.442695
    %v56 = vpow.pop %v55
    %v57 = vmul.f32 %v54, 1.442695
    %v58 = vpow.pop %v57
    %v59 = vadd.f32 %v56, 1.0
    %v60 = vadd.f32 %v58, 1.0
    %v61 = vrcp.pop %v59
    %v62 = vmul.f32 %v59, %v61
    %v63 = vsub.f32 1.0, %v62
    %v64 = vmul.f32 %v61, %v63
    %v65 = vadd.f32 %v61, %v64
    %vm66 = vweird.f32 %v59
    %vm67 = vweird.f32 %v61
    %vm68 = vmor %vm66, %vm67
    %v69 = vsel %vm68, %v61, %v65
    %v70 = vand.u32 2147483647, %v59
    %vm71 = vcmp.eq.f32.partialorder %v70, 8.507059e+37
    %v72 = vand.u32 %v59, 2147483648
    %v73 = vor.u32 1.1754944e-38, %v72
    %v74 = vsel %vm71, %v73, %v69
    %v75 = vmul.f32 1.0, %v74
    %v76 = vrcp.pop %v60
    %v77 = vmul.f32 %v60, %v76
    %v78 = vsub.f32 1.0, %v77
    %v79 = vmul.f32 %v76, %v78
    %v80 = vadd.f32 %v76, %v79
    %vm81 = vweird.f32 %v60
    %vm82 = vweird.f32 %v76
    %vm83 = vmor %vm81, %vm82
    %v84 = vsel %vm83, %v76, %v80
    %v85 = vand.u32 2147483647, %v60
    %vm86 = vcmp.eq.f32.partialorder %v85, 8.507059e+37
    %v87 = vand.u32 %v60, 2147483648
    %v88 = vor.u32 1.1754944e-38, %v87
    %v89 = vsel %vm86, %v88, %v84
    %v90 = vmul.f32 1.0, %v89
    %v91 = vld [vmem:[#allocation8] sm:$0xff]
    %v92 = vld [vmem:[#allocation8 + $0x8] sm:$0xff]
    %v93 = vld [vmem:[#allocation2] sm:$0xff]
    %v94 = vmul.f32 %v75, %v91
    %v95 = vmul.f32 %v90, %v92
    %v96 = vadd.f32 %v94, %v95
    %v97 = vadd.f32 %v93, %v96
    %98 = vst [vmem:[#allocation2] sm:$0xff] %v97
    %v99 = vld [vmem:[#allocation3] sm:$0xff]
    %v100 = vadd.f32 %v75, %v90
    %v101 = vadd.f32 %v99, %v100
    %102 = vst [vmem:[#allocation3] sm:$0xff] %v101
    %v103 = vld [vmem:[#allocation4] sm:$0xff]
    %v104 = vadd.f32 %v91, %v92
    %v105 = vadd.f32 %v103, %v104
    %106 = vst [vmem:[#allocation4] sm:$0xff] %v105
    // Predicated region
    $region22: #{tpu_custom_call.1} parent=1 // pred_check
      %p107 = pneg %p44
    $region23: #{tpu_custom_call.1} parent=1 // pred_check_branch
      %109 = sbr.rel (%p107) target = $region25
    $region24: #{tpu_custom_call.1} parent=1 // pred_region
      %v110 = vld [vmem:[#allocation2] sm:$0xff]
      %111 = vadd.xlane.f32.xlu0 %v110
      %v112 = vpop.xlane.xlu0 %111
      %v113 = vrot.slane %v112, 4
      %v114 = vadd.f32 %v112, %v113
      %v115 = vrot.slane %v114, 2
      %v116 = vadd.f32 %v114, %v115
      %v117 = vrot.slane %v116, 1
      %v118 = vadd.f32 %v116, %v117
      %s119 = vtos %v118
      %v120 = vld [vmem:[#allocation3] sm:$0xff]
      %121 = vadd.xlane.f32.xlu0 %v120
      %v122 = vpop.xlane.xlu0 %121
      %v123 = vrot.slane %v122, 4
      %v124 = vadd.f32 %v122, %v123
      %v125 = vrot.slane %v124, 2
      %v126 = vadd.f32 %v124, %v125
      %v127 = vrot.slane %v126, 1
      %v128 = vadd.f32 %v126, %v127
      %s129 = vtos %v128
      %v130 = vld [vmem:[#allocation4] sm:$0xff]
      %131 = vadd.xlane.f32.xlu0 %v130
      %v132 = vpop.xlane.xlu0 %131
      %v133 = vrot.slane %v132, 4
      %v134 = vadd.f32 %v132, %v133
      %v135 = vrot.slane %v134, 2
      %v136 = vadd.f32 %v134, %v135
      %v137 = vrot.slane %v136, 1
      %v138 = vadd.f32 %v136, %v137
      %s139 = vtos %v138
      %s140 = sadd.f32 %s129, %s139
      %s141 = smul.f32 %s119, 2.0
      %s142 = sadd.f32 %s141, 1.0
      %s143 = sadd.f32 %s140, 1.0
      %v144 = vstv %s143
      %v145 = vrcp.pop %v144
      %v146 = vmul.f32 %v144, %v145
      %v147 = vsub.f32 1.0, %v146
      %v148 = vmul.f32 %v145, %v147
      %v149 = vadd.f32 %v145, %v148
      %vm150 = vweird.f32 %v144
      %vm151 = vweird.f32 %v145
      %vm152 = vmor %vm150, %vm151
      %v153 = vsel %vm152, %v145, %v149
      %v154 = vand.u32 2147483647, %v144
      %vm155 = vcmp.eq.f32.partialorder %v154, 8.507059e+37
      %v156 = vand.u32 %v144, 2147483648
      %v157 = vor.u32 1.1754944e-38, %v156
      %v158 = vsel %vm155, %v157, %v153
      %s159 = vtos %v158
      %s160 = smul.f32 %s142, %s159
      %s161 = ssub.f32 1.0, %s160
      %s162 = scalar_lea.smem [#allocation10], 0
      %163 = sst [smem:[%s162]] %s161
    $region25: #{tpu_custom_call.1} parent=1 // pred_fallthru
      _
    // Predicated region
    $region26: #{tpu_custom_call.1} parent=1 // pred_check
      _
    $region27: #{tpu_custom_call.1} parent=1 // pred_check_branch
      %165 = sbr.rel (0) target = $region29
    $region28: #{tpu_custom_call.1} parent=1 // pred_region
      %167 = vsyncadd [#allocation7], 0
      %s169 = sshll.u32 %s2, 4
      %s170 = int_to_ptr.hbm [resolvable:$true] %s169
      %172 = dma.smem_to_hbm [#allocation10], 16, %s170, [#allocation7]
    $region29: #{tpu_custom_call.1} parent=1 // pred_fallthru
      _
    // Predicated region
    $region30: #{tpu_custom_call.1} parent=1 // pred_check
      _
    $region31: #{tpu_custom_call.1} parent=1 // pred_check_branch
      %174 = sbr.rel (0) target = $region33
    $region32: #{tpu_custom_call.1} parent=1 // pred_region
      %176 = dma.done [#allocation7], 16
    $region33: #{tpu_custom_call.1} parent=1 // pred_fallthru
      _
    %177 = sfence
    %178 = vsyncpa [#allocation6], 1
    %179 = vsyncpa [#allocation9], 1
    %180 = vsyncpa [#allocation7], 1

</llo_original>
